<compile_context>
chip_gen: v7x
topology: tpu7x:2x2x1
jax: 0.10.0
libtpu: 0.0.40
codegen_flags: <defaults>
</compile_context>

<pallas_src>
import math

import jax
import jax.numpy as jnp
from jax.experimental import pallas as pl
from jax.experimental.pallas import tpu as pltpu


def _make_sinusoidal_kernel(half_dim: int):
    lane_aligned = (half_dim % 128 == 0)

    def kernel(t_ref, freq_ref, out_ref):
        # t_ref: (tb, 1) int/float, freq_ref: (1, half_dim) f32, out_ref: (tb, 2*half_dim) f32
        t = t_ref[...].astype(jnp.float32)              # cast in-kernel (VPU convert)
        ang = t * freq_ref[...]                          # (tb, half_dim), bit-identical to ref
        s = jnp.sin(ang)
        c = jnp.cos(ang)
        if lane_aligned:
            # Both halves are 128-lane aligned -> two unmasked, lane-dense stores.
            out_ref[:, :half_dim] = s
            out_ref[:, half_dim:] = c
        else:
            # Small dims: assemble in-register and issue one full-width store.
            out_ref[...] = jnp.concatenate([s, c], axis=-1)

    return kernel


def sinusoidal_positional_embedding(time: jax.Array, dim: int) -> jax.Array:
    """time: (B,) int or float timesteps. Returns (B, dim) float32 embedding."""
    # Same restriction as the PyTorch module (log(10000)/(half_dim-1) needs half_dim > 1,
    # and cat(sin, cos) assumes an even dim).
    assert dim % 2 == 0 and dim >= 4, "dim must be even and >= 4"
    half_dim = dim // 2

    # Frequency table: computed once in the wrapper with exactly the reference's ops so
    # the in-kernel angle t*freq is bit-identical (XLA constant-folds this).
    scale = math.log(10000.0) / (half_dim - 1)
    freqs = jnp.exp(jnp.arange(half_dim, dtype=jnp.float32) * (-scale)).reshape(1, half_dim)

    time_col = time.reshape(-1, 1)                       # keep original dtype; cast in-kernel
    B = time_col.shape[0]

    # ---- batch-tile sizing from an explicit VMEM budget (all generations) -------------
    # Double-buffered VMEM bytes per batch row:
    #   output row: 4*dim B ; timestep column row: lane-padded to 128 lanes -> 512 B.
    bytes_per_row = 2 * (4 * dim + 4 * 128)
    vmem_budget = 12 << 20          # < 16 MiB v5e scoped default; yields ~3-5 MiB out tiles
    tb_budget = max(8, (vmem_budget // bytes_per_row) // 8 * 8)

    if B > tb_budget:
        tb = tb_budget                                   # >= 2 grid steps -> both v7x TCs
    else:
        # Whole batch fits in one budgeted tile.  Split into two blocks only if each half
        # still holds >= 1 MiB of output (amortizes the ~0.35 us per-step overhead), so the
        # "parallel" axis can use v7x's second TensorCore without hurting v5e/v6e.
        half_rows = ((B + 1) // 2 + 7) // 8 * 8
        if half_rows < B and half_rows * dim * 4 >= (1 << 20):
            tb = half_rows
        else:
            tb = B                                       # single full-extent block (always legal)

    grid = (pl.cdiv(B, tb),)

    out = pl.pallas_call(
        _make_sinusoidal_kernel(half_dim),
        out_shape=jax.ShapeDtypeStruct((B, dim), jnp.float32),
        grid=grid,
        in_specs=[
            pl.BlockSpec((tb, 1), lambda i: (i, 0)),         # timestep column, tiled over B
            pl.BlockSpec((1, half_dim), lambda i: (0, 0)),   # constant frequency row
        ],
        out_specs=pl.BlockSpec((tb, dim), lambda i: (i, 0)),
        compiler_params=pltpu.CompilerParams(
            dimension_semantics=("parallel",)),              # independent tiles
    )(time_col, freqs)

    # TODO(synk): for production, fuse this op as the prologue of the downstream time-MLP
    # matmul kernel (write sin/cos into a VMEM scratch feeding the MXU LHS); a standalone
    # launch plus the HBM write+read of (B, dim) dominates at typical diffusion sizes.
    return out


def _reference(time: jax.Array, dim: int) -> jax.Array:
    # Faithful port of the PyTorch module.
    half_dim = dim // 2
    emb = math.log(10000.0) / (half_dim - 1)
    emb = jnp.exp(jnp.arange(half_dim, dtype=jnp.float32) * -emb)
    emb = time.astype(jnp.float32)[:, None] * emb[None, :]
    return jnp.concatenate([jnp.sin(emb), jnp.cos(emb)], axis=-1)


if __name__ == "__main__":
    key = jax.random.PRNGKey(0)
    B, dim = 8, 32
    # diffusion timesteps: integer steps in [0, 1000); cast to f32 happens inside the kernel
    time = jax.random.randint(key, (B,), 0, 1000)

    out = sinusoidal_positional_embedding(time, dim)
    out = jax.block_until_ready(out)

    ref = _reference(time, dim)
    assert out.shape == (B, dim) and out.dtype == jnp.float32
    # The angle t*freq is bit-identical to the reference and true sin/cos are used, so the
    # only residual difference is Mosaic-vs-XLA transcendental range reduction at |x| ~ 1e3
    # (a few ULPs of the angle ~ 6e-5).  2e-4 bounds that (5x tighter than before) while
    # still catching any real layout/index bug.
    assert jnp.allclose(out, ref, atol=2e-4, rtol=1e-5), "mismatch vs reference"

    print("KERNEL_OK")
</pallas_src>

<mosaic_0001>
module attributes {stable_mosaic.version = 11 : i64} {
  func.func @kernel(%arg0: i32, %arg1: memref<8x1xi32, #tpu.memory_space<vmem>>, %arg2: memref<1x16xf32, #tpu.memory_space<vmem>>, %arg3: memref<8x32xf32, #tpu.memory_space<vmem>>) attributes {dimension_semantics = [#tpu.dimension_semantics<parallel>], iteration_bounds = array<i64: 1>, scalar_prefetch = 0 : i64, scratch_operands = 0 : i64, tpu.core_type = #tpu.core_type<tc>, window_params = [{transform_indices = @transform_0, window_bounds = array<i64: 8, 1>}, {pipeline_mode = #tpu.pipeline_mode<synchronous>, transform_indices = @transform_1, window_bounds = array<i64: 1, 16>}, {transform_indices = @transform_2, window_bounds = array<i64: 8, 32>}]} {
    %c0 = arith.constant 0 : index
    %c0_0 = arith.constant 0 : index
    %0 = vector.load %arg1[%c0, %c0_0] : memref<8x1xi32, #tpu.memory_space<vmem>>, vector<8x1xi32>
    %1 = arith.sitofp %0 : vector<8x1xi32> to vector<8x1xf32>
    %c0_1 = arith.constant 0 : index
    %c0_2 = arith.constant 0 : index
    %2 = vector.load %arg2[%c0_1, %c0_2] : memref<1x16xf32, #tpu.memory_space<vmem>>, vector<1x16xf32>
    %3 = vector.broadcast %1 : vector<8x1xf32> to vector<8x16xf32>
    %4 = vector.broadcast %2 : vector<1x16xf32> to vector<8x16xf32>
    %5 = arith.mulf %3, %4 : vector<8x16xf32>
    %6 = math.sin %5 : vector<8x16xf32>
    %7 = math.cos %5 : vector<8x16xf32>
    %8 = tpu.concatenate %6, %7 in 1 : vector<8x16xf32>, vector<8x16xf32> -> vector<8x32xf32>
    %c0_3 = arith.constant 0 : index
    %c0_4 = arith.constant 0 : index
    %9 = vector.load %arg3[%c0_3, %c0_4] : memref<8x32xf32, #tpu.memory_space<vmem>>, vector<8x32xf32>
    tpu.vector_store %arg3[%c0_3, %c0_4], %8 {strides = array<i32>} : memref<8x32xf32, #tpu.memory_space<vmem>>, vector<8x32xf32>,
    return
  }
  func.func @transform_0(%arg0: i32) -> (i32, i32) {
    %c0_i32 = arith.constant 0 : i32
    %c0_i32_0 = arith.constant 0 : i32
    return %arg0, %c0_i32 : i32, i32
  }
  func.func @transform_1(%arg0: i32) -> (i32, i32) {
    %c0_i32 = arith.constant 0 : i32
    %c0_i32_0 = arith.constant 0 : i32
    %c0_i32_1 = arith.constant 0 : i32
    return %c0_i32, %c0_i32_0 : i32, i32
  }
  func.func @transform_2(%arg0: i32) -> (i32, i32) {
    %c0_i32 = arith.constant 0 : i32
    %c0_i32_0 = arith.constant 0 : i32
    return %arg0, %c0_i32 : i32, i32
  }
}

</mosaic_0001>

<llo_original>
// kernel: tpu_custom_call.1
$region0: #{tpu_custom_call.1}
  #allocation0 [shape = 'u32[]', space=smem, size = 0x4, offset = 0x4, fixed_abs, tag = 'smem constant byte address 0x4 - core index']
  #allocation1 [shape = 'u32[144,128]{1,0:T(1,128)}', space=vmem, size = 0x12000, scoped, tag = 'internal scratch']
  %s0 = inlined_call_operand.vmem [shape: s32[8,1], index: 0, kind: input, shape index: {}]
  %s1 = inlined_call_operand.vmem [shape: f32[1,16], index: 1, kind: input, shape index: {}]
  %s2 = inlined_call_operand.hbm [shape: f32[8,32], index: 2, kind: output, shape index: {}]
  %s3 = sld [smem:[#allocation0]]
  $region18: #{tpu_custom_call.1} parent=0
    _
  %s5 = ssub.s32 1, %s3
  %s6 = scalar_select 0, %s5, %s3
  $region1: #{tpu_custom_call.1} parent=0
    #allocation2 [shape = 'u8[4096]{0}', space=vmem, size = 0x1000, scoped, tag = 'output window, operand 0, single buffered']
    #allocation3 [shape = 's32[1]{0}', space=sflag, size = 0x4, scoped, tag = 'scoped memory for tpu_custom_call.1']
    %7 = vsyncpa [#allocation3], 0
    // Predicated region
    $region2: #{tpu_custom_call.1} parent=1 // pred_check
      _
    $region3: #{tpu_custom_call.1} parent=1 // pred_check_branch
      %9 = sbr.rel (0) target = $region5
    $region4: #{tpu_custom_call.1} parent=1 // pred_region
      _
    $region5: #{tpu_custom_call.1} parent=1 // pred_fallthru
      _
    // Predicated region
    $region6: #{tpu_custom_call.1} parent=1 // pred_check
      _
    $region7: #{tpu_custom_call.1} parent=1 // pred_check_branch
      %11 = sbr.rel (0) target = $region9
    $region8: #{tpu_custom_call.1} parent=1 // pred_region
      _
    $region9: #{tpu_custom_call.1} parent=1 // pred_fallthru
      _
    %v12 = vld [vmem:[%s0] sm:$0xff]
    %v13 = vcvt.s32.f32 %v12
    %v14 = vld [vmem:[%s1] sm:$0x1]
    %16 = vset.pattern.permute.xlu0 0
    %17 = vperm.xlu0 %16, %v13
    %v18 = vpop.permute.xlu0 %17
    %v21 = vlaneseq
    %v22 = vshrl.u32 %v21, 7
    %v23 = vsub.s32 0, %v22
    %v24 = vrot.slane %v14, %v23
    %v26 = vmul.f32 %v18, %v24
    %v27 = vand.u32 2147483647, %v26
    %vm28 = vcmp.le.f32.partialorder %v27, 0.7853982
    %vm29 = vcmp.lt.s32.totalorder %v26, 0
    %v30 = vand.u32 %v26, 2139095040
    %v31 = vshrl.u32 %v30, 23
    %v32 = vsub.s32 %v31, 127
    %v33 = vand.u32 2147483647, %v26
    %v34 = vand.u32 %v33, 8388607
    %v35 = vor.u32 %v34, 8388608
    %v36 = vsub.s32 0, %v35
    %v37 = vadd.s32 %v32, 1
    %vm38 = vcmp.gt.s32.totalorder %v37, 0
    %v39 = vsel %vm38, %v37, 0
    %v40 = vshrl.u32 %v39, 5
    %v41 = vand.u32 %v39, 31
    %v42 = vsub.s32 32, %v41
    %v43 = vshrl.u32 683565275, %v42
    %v44 = vshll.u32 683565275, %v41
    %v45 = vshrl.u32 2475754826, %v42
    %v46 = vor.u32 %v44, %v45
    %v47 = vshll.u32 2475754826, %v41
    %v48 = vshrl.u32 2131351028, %v42
    %v49 = vor.u32 %v47, %v48
    %v50 = vshll.u32 2131351028, %v41
    %v51 = vshrl.u32 2102212464, %v42
    %v52 = vor.u32 %v50, %v51
    %v53 = vshll.u32 2102212464, %v41
    %v54 = vshrl.u32 920167782, %v42
    %v55 = vor.u32 %v53, %v54
    %v56 = vshll.u32 920167782, %v41
    %v57 = vshrl.u32 1326507024, %v42
    %v58 = vor.u32 %v56, %v57
    %vm59 = vcmp.lt.s32.totalorder %v40, 1
    %vm60 = vcmp.lt.s32.totalorder %v40, 2
    %vm61 = vcmp.lt.s32.totalorder %v40, 3
    %vm62 = vcmp.lt.s32.totalorder %v40, 4
    %v63 = vsel %vm59, %v43, %v46
    %v64 = vsel %vm62, %v52, 2102212464
    %v65 = vsel %vm61, %v49, %v64
    %v66 = vsel %vm60, %v63, %v65
    %v67 = vsel %vm59, %v46, %v49
    %v68 = vsel %vm62, %v55, 920167782
    %v69 = vsel %vm61, %v52, %v68
    %v70 = vsel %vm60, %v67, %v69
    %v71 = vsel %vm59, %v49, %v52
    %v72 = vsel %vm62, %v58, 1326507024
    %v73 = vsel %vm61, %v55, %v72
    %v74 = vsel %vm60, %v71, %v73
    %v75 = vshll.u32 %v35, 8
    %v76 = vmul.u32.u64.compose %v75, %v74
    %v77 = vextract.low.u32 %v76
    %v78 = vextract.high.u32 %v76
    %v79 = vmul.u32.u64.compose %v75, %v70
    %v80 = vextract.low.u32 %v79
    %v81 = vextract.high.u32 %v79
    %v82 = vmul.u32 %v75, %v66
    %v83 = vadd.s32 %v78, %v80
    %vm84 = vc.u32 %v78, %v80
    %v85 = vadd.s32 %v81, 1
    %v86 = vsel %vm84, %v85, %v81
    %v87 = vadd.s32 %v82, %v86
    %v88 = vadd.s32 %v87, 536870912
    %v89 = vshrl.u32 %v88, 30
    %v90 = vshll.u32 %v89, 30
    %v91 = vsub.s32 %v87, %v90
    %vm92 = vcmp.lt.s32.totalorder %v91, 0
    %v93 = vsub.s32 0, %v91
    %v94 = vsel %vm92, %v93, %v91
    %v95 = vclz %v94
    %v96 = vsub.s32 %v95, 2
    %vm97 = vcmp.gt.s32.totalorder 0, %v96
    %v98 = vsel %vm97, 0, %v96
    %v99 = vsub.s32 32, %v98
    %v100 = vshll.u32 %v91, %v98
    %v101 = vshrl.u32 %v83, %v99
    %v102 = vor.u32 %v100, %v101
    %v103 = vsub.s32 4294967266, %v98
    %v104 = vadd.s32 %v103, 127
    %v105 = vshll.u32 %v104, 23
    %v106 = vor.u32 4788187, %v105
    %v107 = vand.u32 2147483647, %v106
    %v109 = vcvt.s32.f32 %v102
    %v110 = vmul.f32 %v109, %v107
    %v111 = vxor.u32 %v110, 2147483648
    %v112 = vsel %vm29, %v111, %v110
    %v113 = vsub.s32 4, %v89
    %v114 = vsel %vm29, %v113, %v89
    %v115 = vsel %vm28, %v26, %v112
    %v116 = vsel %vm28, 0, %v114
    %v117 = vcosq.f32.pop %v115
    %v118 = vsinq.f32.pop %v115
    %vm119 = vweird.f32 %v26
    %v120 = vadd.s32 %v116, 3
    %v121 = vand.u32 %v120, 3
    %vm122 = vcmp.lt.s32.totalorder %v121, 2
    %vm123 = vcmp.eq.s32.totalorder %v121, 0
    %v124 = vxor.u32 %v118, 2147483648
    %v125 = vsel %vm123, %v117, %v124
    %vm126 = vcmp.eq.s32.totalorder %v121, 2
    %v127 = vxor.u32 %v117, 2147483648
    %v128 = vsel %vm126, %v127, %v118
    %v129 = vsel %vm122, %v125, %v128
    %v130 = vsel %vm119, nan, %v129
    %v131 = vand.u32 2147483647, %v26
    %vm132 = vcmp.le.f32.partialorder %v131, 0.7853982
    %vm133 = vcmp.lt.s32.totalorder %v26, 0
    %v134 = vand.u32 %v26, 2139095040
    %v135 = vshrl.u32 %v134, 23
    %v136 = vsub.s32 %v135, 127
    %v137 = vand.u32 2147483647, %v26
    %v138 = vand.u32 %v137, 8388607
    %v139 = vor.u32 %v138, 8388608
    %v140 = vsub.s32 0, %v139
    %v141 = vadd.s32 %v136, 1
    %vm142 = vcmp.gt.s32.totalorder %v141, 0
    %v143 = vsel %vm142, %v141, 0
    %v144 = vshrl.u32 %v143, 5
    %v145 = vand.u32 %v143, 31
    %v146 = vsub.s32 32, %v145
    %v147 = vshrl.u32 683565275, %v146
    %v148 = vshll.u32 683565275, %v145
    %v149 = vshrl.u32 2475754826, %v146
    %v150 = vor.u32 %v148, %v149
    %v151 = vshll.u32 2475754826, %v145
    %v152 = vshrl.u32 2131351028, %v146
    %v153 = vor.u32 %v151, %v152
    %v154 = vshll.u32 2131351028, %v145
    %v155 = vshrl.u32 2102212464, %v146
    %v156 = vor.u32 %v154, %v155
    %v157 = vshll.u32 2102212464, %v145
    %v158 = vshrl.u32 920167782, %v146
    %v159 = vor.u32 %v157, %v158
    %v160 = vshll.u32 920167782, %v145
    %v161 = vshrl.u32 1326507024, %v146
    %v162 = vor.u32 %v160, %v161
    %vm163 = vcmp.lt.s32.totalorder %v144, 1
    %vm164 = vcmp.lt.s32.totalorder %v144, 2
    %vm165 = vcmp.lt.s32.totalorder %v144, 3
    %vm166 = vcmp.lt.s32.totalorder %v144, 4
    %v167 = vsel %vm163, %v147, %v150
    %v168 = vsel %vm166, %v156, 2102212464
    %v169 = vsel %vm165, %v153, %v168
    %v170 = vsel %vm164, %v167, %v169
    %v171 = vsel %vm163, %v150, %v153
    %v172 = vsel %vm166, %v159, 920167782
    %v173 = vsel %vm165, %v156, %v172
    %v174 = vsel %vm164, %v171, %v173
    %v175 = vsel %vm163, %v153, %v156
    %v176 = vsel %vm166, %v162, 1326507024
    %v177 = vsel %vm165, %v159, %v176
    %v178 = vsel %vm164, %v175, %v177
    %v179 = vshll.u32 %v139, 8
    %v180 = vmul.u32.u64.compose %v179, %v178
    %v181 = vextract.low.u32 %v180
    %v182 = vextract.high.u32 %v180
    %v183 = vmul.u32.u64.compose %v179, %v174
    %v184 = vextract.low.u32 %v183
    %v185 = vextract.high.u32 %v183
    %v186 = vmul.u32 %v179, %v170
    %v187 = vadd.s32 %v182, %v184
    %vm188 = vc.u32 %v182, %v184
    %v189 = vadd.s32 %v185, 1
    %v190 = vsel %vm188, %v189, %v185
    %v191 = vadd.s32 %v186, %v190
    %v192 = vadd.s32 %v191, 536870912
    %v193 = vshrl.u32 %v192, 30
    %v194 = vshll.u32 %v193, 30
    %v195 = vsub.s32 %v191, %v194
    %vm196 = vcmp.lt.s32.totalorder %v195, 0
    %v197 = vsub.s32 0, %v195
    %v198 = vsel %vm196, %v197, %v195
    %v199 = vclz %v198
    %v200 = vsub.s32 %v199, 2
    %vm201 = vcmp.gt.s32.totalorder 0, %v200
    %v202 = vsel %vm201, 0, %v200
    %v203 = vsub.s32 32, %v202
    %v204 = vshll.u32 %v195, %v202
    %v205 = vshrl.u32 %v187, %v203
    %v206 = vor.u32 %v204, %v205
    %v207 = vsub.s32 4294967266, %v202
    %v208 = vadd.s32 %v207, 127
    %v209 = vshll.u32 %v208, 23
    %v210 = vor.u32 4788187, %v209
    %v211 = vand.u32 2147483647, %v210
    %v213 = vcvt.s32.f32 %v206
    %v214 = vmul.f32 %v213, %v211
    %v215 = vxor.u32 %v214, 2147483648
    %v216 = vsel %vm133, %v215, %v214
    %v217 = vsub.s32 4, %v193
    %v218 = vsel %vm133, %v217, %v193
    %v219 = vsel %vm132, %v26, %v216
    %v220 = vsel %vm132, 0, %v218
    %v221 = vcosq.f32.pop %v219
    %v222 = vsinq.f32.pop %v219
    %vm223 = vweird.f32 %v26
    %v224 = vand.u32 %v220, 3
    %vm225 = vcmp.lt.s32.totalorder %v224, 2
    %vm226 = vcmp.eq.s32.totalorder %v224, 0
    %v227 = vxor.u32 %v222, 2147483648
    %v228 = vsel %vm226, %v221, %v227
    %vm229 = vcmp.eq.s32.totalorder %v224, 2
    %v230 = vxor.u32 %v221, 2147483648
    %v231 = vsel %vm229, %v230, %v222
    %v232 = vsel %vm225, %v228, %v231
    %v233 = vsel %vm223, nan, %v232
    %235 = vrot.lane.b32.xlu0 %v233, 16
    %v236 = vpop.permute.xlu0 %235
    %vm238 = vcmask 130048
    %v239 = vsel %vm238, %v130, %v236
    %vm240 = vcmask 261120
    %241 = vst.msk [vmem:[#allocation2] sm:$0xff] %vm240, %v239
    // Predicated region
    $region10: #{tpu_custom_call.1} parent=1 // pred_check
      _
    $region11: #{tpu_custom_call.1} parent=1 // pred_check_branch
      %243 = sbr.rel (0) target = $region13
    $region12: #{tpu_custom_call.1} parent=1 // pred_region
      %s245 = ssub.s32 128, 128
      %246 = vsyncadd [#allocation3], %s245
      %s248 = sshll.u32 [#allocation2], 4
      %s249 = int_to_ptr.vmem [resolvable:$true] %s248
      %251 = dma.vmem_to_hbm [thread:$0]  %s249, 128, %s2, [#allocation3]
    $region13: #{tpu_custom_call.1} parent=1 // pred_fallthru
      _
    // Predicated region
    $region14: #{tpu_custom_call.1} parent=1 // pred_check
      _
    $region15: #{tpu_custom_call.1} parent=1 // pred_check_branch
      %253 = sbr.rel (0) target = $region17
    $region16: #{tpu_custom_call.1} parent=1 // pred_region
      %254 = dma.done [#allocation3], 128
    $region17: #{tpu_custom_call.1} parent=1 // pred_fallthru
      _
    %255 = vsyncpa [#allocation3], 1

</llo_original>
